<compile_context>
chip_gen: v7x
topology: tpu7x:2x2x1
jax: 0.10.0
libtpu: 0.0.40
codegen_flags: <defaults>
</compile_context>

<pallas_src>
import math

import jax
import jax.numpy as jnp
from jax.experimental import pallas as pl
from jax.experimental.pallas import tpu as pltpu

_LANES = 128
_BLOCK_ROWS = 512            # (512, 128) f32 = 256 KiB per block
_SMALL_ELEMS = 8 * _LANES    # <= one (8,128) vreg tile: skip grid/layout plumbing


def _add_full_kernel(x_ref, p_ref, o_ref):
    # Whole (small) arrays resident in VMEM; one fused VPU add.
    # jnp broadcasting handles p.shape != x.shape (e.g. (2,2) + (B,2,2)).
    o_ref[...] = x_ref[...] + p_ref[...]


def _add_tiled_kernel(x_ref, p_row_ref, o_ref):
    # x_ref / o_ref: (block_rows, 128) lane-dense tiles.
    # p_row_ref:     (1, 128) periodic copy of p, broadcast over the sublanes
    #                in-kernel (p is never materialized at full size in HBM).
    o_ref[...] = x_ref[...] + p_row_ref[...]


def _forward_small(x, p, out_shape):
    # Direct path: full-array blocks, no grid, no padding. Used for the actual
    # (2,2) Task input where everything else is fixed overhead.
    xb = x if x.shape == out_shape else jnp.broadcast_to(x, out_shape)
    return pl.pallas_call(
        _add_full_kernel,
        out_shape=jax.ShapeDtypeStruct(out_shape, jnp.float32),
    )(xb, p)


def _forward_tiled(x, p, out_shape, n):
    rows = n // _LANES
    block_rows = min(_BLOCK_ROWS, rows)

    x2 = x.reshape(rows, _LANES)                      # free: n % 128 == 0
    reps = _LANES // p.size
    p_row = jnp.tile(p.reshape(1, -1), (1, reps))     # tiny (1, 128) periodic tile

    out2 = pl.pallas_call(
        _add_tiled_kernel,
        out_shape=jax.ShapeDtypeStruct((rows, _LANES), jnp.float32),
        grid=(pl.cdiv(rows, block_rows),),
        in_specs=[
            pl.BlockSpec((block_rows, _LANES), lambda i: (i, 0)),  # x tile
            pl.BlockSpec((1, _LANES), lambda i: (0, 0)),           # p row (replicated)
        ],
        out_specs=pl.BlockSpec((block_rows, _LANES), lambda i: (i, 0)),
        compiler_params=pltpu.CompilerParams(
            dimension_semantics=("parallel",),
        ),
    )(x2, p_row)
    return out2.reshape(out_shape)


@jax.jit
def task_forward(x: jax.Array, p: jax.Array) -> jax.Array:
    """out = p + x, matching Task.forward."""
    x = jnp.asarray(x, jnp.float32)
    p = jnp.asarray(p, jnp.float32)

    out_shape = jnp.broadcast_shapes(p.shape, x.shape)
    n = math.prod(out_shape) if out_shape else 1

    # Tiled lane-dense path only when it is actually cheaper and the periodic
    # in-kernel broadcast of p is valid (trailing dims of the output equal
    # p.shape, p.size divides 128, and the reshape to (rows, 128) is free).
    use_tiled = (
        n > _SMALL_ELEMS
        and n % _LANES == 0
        and x.shape == out_shape
        and p.ndim >= 1
        and out_shape[-p.ndim:] == p.shape
        and p.size > 0
        and _LANES % p.size == 0
    )
    if use_tiled:
        return _forward_tiled(x, p, out_shape, n)
    return _forward_small(x, p, out_shape)


if __name__ == "__main__":
    key = jax.random.PRNGKey(0)
    k_small, k_big = jax.random.split(key)

    # Parameter exactly as Task.__init__: p = ones(2, 2).
    p = jnp.ones((2, 2), dtype=jnp.float32)

    # Primary workload, matching the module's forward: x of shape (2, 2).
    x_small = jax.random.normal(k_small, (2, 2), dtype=jnp.float32)
    out_small = jax.block_until_ready(task_forward(x_small, p))
    ref_small = p + x_small
    assert out_small.shape == (2, 2) and out_small.dtype == jnp.float32
    assert jnp.allclose(out_small, ref_small, atol=1e-6), (out_small, ref_small)

    # Batched stack of 2x2 inputs exercising the lane-dense gridded path
    # (rows=1024 -> two (512,128) blocks on the parallel grid axis).
    x_big = jax.random.normal(k_big, (32768, 2, 2), dtype=jnp.float32)
    out_big = jax.block_until_ready(task_forward(x_big, p))
    ref_big = p + x_big
    assert out_big.shape == x_big.shape and out_big.dtype == jnp.float32
    assert jnp.allclose(out_big, ref_big, atol=1e-6)

    print("KERNEL_OK")
</pallas_src>

<mosaic_0001>
module attributes {stable_mosaic.version = 11 : i64} {
  func.func @_add_full_kernel(%arg0: memref<2x2xf32, #tpu.memory_space<vmem>>, %arg1: memref<2x2xf32, #tpu.memory_space<vmem>>, %arg2: memref<2x2xf32, #tpu.memory_space<vmem>>) attributes {dimension_semantics = [], scalar_prefetch = 0 : i64, scratch_operands = 0 : i64, tpu.core_type = #tpu.core_type<tc>} {
    %c0 = arith.constant 0 : index
    %c0_0 = arith.constant 0 : index
    %0 = vector.load %arg0[%c0, %c0_0] : memref<2x2xf32, #tpu.memory_space<vmem>>, vector<2x2xf32>
    %c0_1 = arith.constant 0 : index
    %c0_2 = arith.constant 0 : index
    %1 = vector.load %arg1[%c0_1, %c0_2] : memref<2x2xf32, #tpu.memory_space<vmem>>, vector<2x2xf32>
    %2 = arith.addf %0, %1 : vector<2x2xf32>
    %c0_3 = arith.constant 0 : index
    %c0_4 = arith.constant 0 : index
    %3 = vector.load %arg2[%c0_3, %c0_4] : memref<2x2xf32, #tpu.memory_space<vmem>>, vector<2x2xf32>
    tpu.vector_store %arg2[%c0_3, %c0_4], %2 {strides = array<i32>} : memref<2x2xf32, #tpu.memory_space<vmem>>, vector<2x2xf32>,
    return
  }
}

</mosaic_0001>

<llo_original>
// kernel: task_forward.1
$region0: #{task_forward.1}
  #allocation0 [shape = 'u32[]', space=smem, size = 0x4, offset = 0x4, fixed_abs, tag = 'smem constant byte address 0x4 - core index']
  #allocation1 [shape = 'u32[144,128]{1,0:T(1,128)}', space=vmem, size = 0x12000, scoped, tag = 'internal scratch']
  %s0 = inlined_call_operand.hbm [shape: f32[2,2], index: 0, kind: input, shape index: {}]
  %s1 = inlined_call_operand.vmem [shape: f32[2,2], index: 1, kind: input, shape index: {}]
  %s2 = inlined_call_operand.hbm [shape: f32[2,2], index: 2, kind: output, shape index: {}]
  %s3 = sld [smem:[#allocation0]]
  $region22: #{task_forward.1} parent=0
    _
  %s5 = ssub.s32 1, %s3
  %s6 = scalar_select 0, %s5, %s3
  $region1: #{task_forward.1} parent=0
    #allocation2 [shape = 'u8[1024]{0}', space=vmem, size = 0x400, scoped, tag = 'input window, operand 0, single buffered']
    #allocation3 [shape = 's32[1]{0}', space=sflag, size = 0x4, scoped, tag = 'scoped memory for task_forward.1']
    #allocation4 [shape = 's32[1]{0}', space=sflag, size = 0x4, scoped, tag = 'scoped memory for task_forward.1']
    #allocation5 [shape = 'u8[1024]{0}', space=vmem, size = 0x400, scoped, tag = 'output window, operand 0, single buffered']
    %7 = vsyncpa [#allocation3], 0
    %8 = vsyncpa [#allocation4], 0
    // Predicated region
    $region2: #{task_forward.1} parent=1 // pred_check
      _
    $region3: #{task_forward.1} parent=1 // pred_check_branch
      %10 = sbr.rel (0) target = $region5
    $region4: #{task_forward.1} parent=1 // pred_region
      %s12 = ssub.s32 32, 32
      %13 = vsyncadd [#allocation3], %s12
      %s15 = sshll.u32 [#allocation2], 4
      %s16 = int_to_ptr.vmem [resolvable:$true] %s15
      %18 = dma.hbm_to_vmem [thread:$0]  %s0, 32, %s16, [#allocation3]
    $region5: #{task_forward.1} parent=1 // pred_fallthru
      _
    // Predicated region
    $region6: #{task_forward.1} parent=1 // pred_check
      _
    $region7: #{task_forward.1} parent=1 // pred_check_branch
      %20 = sbr.rel (0) target = $region9
    $region8: #{task_forward.1} parent=1 // pred_region
      _
    $region9: #{task_forward.1} parent=1 // pred_fallthru
      _
    // Predicated region
    $region10: #{task_forward.1} parent=1 // pred_check
      _
    $region11: #{task_forward.1} parent=1 // pred_check_branch
      %22 = sbr.rel (0) target = $region13
    $region12: #{task_forward.1} parent=1 // pred_region
      %23 = dma.done [#allocation3], 32
    $region13: #{task_forward.1} parent=1 // pred_fallthru
      _
    %v24 = vld [vmem:[#allocation2] sm:$0x3]
    %v25 = vld [vmem:[%s1] sm:$0x3]
    %v26 = vadd.f32 %v24, %v25
    %vm27 = vcmask 9216
    %28 = vst.msk [vmem:[#allocation5] sm:$0x3] %vm27, %v26
    // Predicated region
    $region14: #{task_forward.1} parent=1 // pred_check
      _
    $region15: #{task_forward.1} parent=1 // pred_check_branch
      %30 = sbr.rel (0) target = $region17
    $region16: #{task_forward.1} parent=1 // pred_region
      %s32 = ssub.s32 32, 32
      %33 = vsyncadd [#allocation4], %s32
      %s35 = sshll.u32 [#allocation5], 4
      %s36 = int_to_ptr.vmem [resolvable:$true] %s35
      %38 = dma.vmem_to_hbm [thread:$0]  %s36, 32, %s2, [#allocation4]
    $region17: #{task_forward.1} parent=1 // pred_fallthru
      _
    // Predicated region
    $region18: #{task_forward.1} parent=1 // pred_check
      _
    $region19: #{task_forward.1} parent=1 // pred_check_branch
      %40 = sbr.rel (0) target = $region21
    $region20: #{task_forward.1} parent=1 // pred_region
      %41 = dma.done [#allocation4], 32
    $region21: #{task_forward.1} parent=1 // pred_fallthru
      _
    %42 = vsyncpa [#allocation3], 1
    %43 = vsyncpa [#allocation4], 1

</llo_original>
